<compile_context>
chip_gen: v7x
topology: tpu7x:2x2x1
jax: 0.10.0
libtpu: 0.0.40
codegen_flags: <defaults>
</compile_context>

<pallas_src>
import functools
import numpy as np
import jax
import jax.numpy as jnp
from jax.experimental import pallas as pl
from jax.experimental.pallas import tpu as pltpu

# ---------------- model hyper-parameters (small, consistent with the module) ----
HIDDEN = 32        # hidden_dim
OUTPUT_DIM = 1
K_NN = 8           # k for knn_graph
AGG_LAYERS = 2
MP_LAYERS = 2
IN_LAYERS = 1
OUT_LAYERS = 3
LOOP = True        # self-loops in knn_graph

MM_DTYPE = jnp.bfloat16   # MXU operand dtype for the MLP matmuls (f32 accumulation).
NEG_BIG = -1e30


def _round_up(n, m):
    return ((n + m - 1) // m) * m


def _elu(y):
    # ELU(alpha=1): y if y > 0 else exp(y) - 1   (kept in f32 on all chips)
    return jnp.where(y > 0, y, jnp.exp(jnp.minimum(y, 0.0)) - 1.0)


@functools.lru_cache(maxsize=None)
def _vmem_capacity_bytes():
    try:
        return int(pltpu.get_tpu_info().vmem_capacity_bytes)
    except Exception:
        return 64 * 1024 * 1024          # conservative fallback (v7x per-TC capacity)


def _vmem_limit_bytes():
    return int(min(_vmem_capacity_bytes() // 2, 64 * 1024 * 1024))


# ================================ Pallas kernels ================================

# ---- fused multi-layer Linear(+ELU) ---------------------------------------------
def _mlp_kernel(x_ref, *refs, acts):
    o_ref = refs[-1]
    wb = refs[:-1]
    h = x_ref[...]                                   # bf16 activations
    n_layers = len(acts)
    for l, act in enumerate(acts):
        w = wb[2 * l][...]                           # bf16 weight (pre-cast)
        b = wb[2 * l + 1][...]                       # f32 bias [1, out]
        y = jnp.dot(h, w, preferred_element_type=jnp.float32) + b
        if act == "elu":
            y = _elu(y)
        h = y.astype(MM_DTYPE) if l + 1 < n_layers else y
    o_ref[...] = h                                   # final layer kept f32


def mlp_forward(x, layers, acts, tile_m=1024):
    """y = act_L(... act_0(x @ W0 + b0) ...), all layers fused in one pallas_call."""
    x = jnp.asarray(x, jnp.float32)
    M, K = x.shape
    out_dim = layers[-1][0].shape[1]
    flat = []
    for (w, b) in layers:
        flat.append(jnp.asarray(w, MM_DTYPE))                      # bf16 weights
        flat.append(jnp.asarray(b, jnp.float32).reshape(1, -1))    # f32 biases
    if M <= tile_m:
        tm, M_pad = M, M
    else:
        tm = tile_m
        M_pad = _round_up(M, tile_m)
    x_p = x if M_pad == M else jnp.pad(x, ((0, M_pad - M), (0, 0)))
    x_p = x_p.astype(MM_DTYPE)                                     # cast once (halves DMA)
    in_specs = [pl.BlockSpec((tm, K), lambda m: (m, 0))]
    in_specs += [pl.BlockSpec(a.shape, lambda m: (0, 0)) for a in flat]
    out = pl.pallas_call(
        functools.partial(_mlp_kernel, acts=tuple(acts)),
        out_shape=jax.ShapeDtypeStruct((M_pad, out_dim), jnp.float32),
        grid=(M_pad // tm,),
        in_specs=in_specs,
        out_specs=pl.BlockSpec((tm, out_dim), lambda m: (m, 0)),
        compiler_params=pltpu.CompilerParams(dimension_semantics=("parallel",)),
    )(x_p, *flat)
    return out[:M] if M_pad != M else out


# ---- pairwise squared distances via MXU (transposed RHS, lane-dense output) ------
def _pairwise_kernel(xi_ref, xt_ref, sqn_ref, o_ref):
    xi = xi_ref[...]                                        # [TI, H]
    g = jnp.dot(xi, xt_ref[...], preferred_element_type=jnp.float32)   # [TI, Np]
    ni = jnp.sum(xi * xi, axis=1, keepdims=True)            # [TI, 1]
    o_ref[...] = jnp.maximum(ni + sqn_ref[...] - 2.0 * g, 0.0)


def pairwise_sqdist(x):
    x = jnp.asarray(x, jnp.float32)
    Np, H = x.shape
    if Np % 128 == 0 and Np >= 512:
        TI = 128
    elif Np % 64 == 0 and Np >= 128:
        TI = 64                                    # >= 2 parallel steps (v7x megacore)
    else:
        TI = Np
    xt = x.T                                        # [H, Np]
    sqn = jnp.sum(x * x, axis=1)[None, :]           # [1, Np]
    return pl.pallas_call(
        _pairwise_kernel,
        out_shape=jax.ShapeDtypeStruct((Np, Np), jnp.float32),
        grid=(Np // TI,),
        in_specs=[
            pl.BlockSpec((TI, H), lambda i: (i, 0)),
            pl.BlockSpec((H, Np), lambda i: (0, 0)),
            pl.BlockSpec((1, Np), lambda i: (0, 0)),
        ],
        out_specs=pl.BlockSpec((TI, Np), lambda i: (i, 0)),
        compiler_params=pltpu.CompilerParams(dimension_semantics=("parallel",)),
    )(x, xt, sqn)


# ---- fused EdgeConv: edge-MLP + masked 'add' aggregation, tiled over neighbors ----
def _edgeconv_kernel(ti_ref, tj_ref, m_ref, *refs):
    acc_ref = refs[-1]
    o_ref = refs[-2]
    wb = refs[:-2]
    n_rest = len(wb) // 2
    n_idx = pl.program_id(1)

    @pl.when(n_idx == 0)
    def _():
        acc_ref[...] = jnp.zeros(acc_ref.shape, acc_ref.dtype)

    ti = ti_ref[...]                       # [TI, D0]  x_i@(W0_top-W0_bot)+b0 (f32)
    tj = tj_ref[...]                       # [TN, D0]  x_j@W0_bot              (f32)
    m = m_ref[...]                         # [TI, TN]  undirected kNN adjacency tile
    TI, D0 = ti.shape
    TN = tj.shape[0]

    # edge features after layer 0: ELU in f32, stored bf16 for the next MXU matmul
    h = _elu(ti[:, None, :] + tj[None, :, :])                  # [TI, TN, D0]
    if n_rest:
        hf = h.astype(MM_DTYPE).reshape(TI * TN, D0)
        for l in range(n_rest):            # remaining edge-MLP layers (ELU after each)
            w = wb[2 * l][...]             # bf16
            b = wb[2 * l + 1][...]         # f32
            y = _elu(jnp.dot(hf, w, preferred_element_type=jnp.float32) + b)
            hf = y.astype(MM_DTYPE) if l + 1 < n_rest else y
        msg = hf.reshape(TI, TN, -1)       # [TI, TN, H] f32
    else:
        msg = h

    # aggr='add' over the masked neighbor tile, accumulated across neighbor tiles
    acc_ref[...] += jnp.sum(m[:, :, None] * msg, axis=1)

    @pl.when(n_idx == pl.num_programs(1) - 1)
    def _():
        o_ref[...] = acc_ref[...]


def _edgeconv_tiles(Np):
    """Derive (TI, TN) from the per-generation VMEM capacity."""
    budget = _vmem_capacity_bytes() // 4        # headroom for pipelined blocks/weights
    tn = 128 if Np % 128 == 0 else Np
    per_pair = 2048                             # ~bytes of lane-padded intermediates
    ti = None
    for c in (128, 64, 32, 16, 8):
        if Np % c == 0 and c * tn * per_pair <= budget and Np // c >= 2:
            ti = c
            break
    if ti is None:
        for c in (64, 32, 16, 8):
            if Np % c == 0:
                ti = c
                break
    if ti is None:
        ti = Np
    return ti, tn


def edgeconv_fused(t_all, adj, rest_flat, h_out):
    """t_all = [x@W_i + b0 | x@W_j]  ->  out[i] = sum_j A[i,j] * mlp_rest(ELU(t_i + t_j))."""
    Np, D2 = t_all.shape
    D0 = D2 // 2
    TI, TN = _edgeconv_tiles(Np)
    in_specs = [
        pl.BlockSpec((TI, D0), lambda i, n: (i, 0)),   # i-half of t_all
        pl.BlockSpec((TN, D0), lambda i, n: (n, 1)),   # j-half of t_all
        pl.BlockSpec((TI, TN), lambda i, n: (i, n)),   # adjacency tile
    ] + [pl.BlockSpec(a.shape, lambda i, n: (0, 0)) for a in rest_flat]
    return pl.pallas_call(
        _edgeconv_kernel,
        out_shape=jax.ShapeDtypeStruct((Np, h_out), jnp.float32),
        grid=(Np // TI, Np // TN),
        in_specs=in_specs,
        out_specs=pl.BlockSpec((TI, h_out), lambda i, n: (i, 0)),
        scratch_shapes=[pltpu.VMEM((TI, h_out), jnp.float32)],
        compiler_params=pltpu.CompilerParams(
            dimension_semantics=("parallel", "arbitrary"),
            vmem_limit_bytes=_vmem_limit_bytes()),
    )(t_all, t_all, adj, *rest_flat)


# ---- masked max pooling as a running-max reduction over node tiles ----------------
def _masked_max_kernel(oh_ref, x_ref, o_ref, acc_ref):
    n = pl.program_id(1)

    @pl.when(n == 0)
    def _():
        acc_ref[...] = jnp.full(acc_ref.shape, NEG_BIG, acc_ref.dtype)

    oh = oh_ref[...]                                        # [TG, TN]
    x = x_ref[...]                                          # [TN, H]
    masked = jnp.where(oh[:, :, None] > 0.0, x[None, :, :], NEG_BIG)
    acc_ref[...] = jnp.maximum(acc_ref[...], jnp.max(masked, axis=1))

    @pl.when(n == pl.num_programs(1) - 1)
    def _():
        o_ref[...] = acc_ref[...]


def masked_max(onehot, x):
    """out[g, :] = max over nodes i with onehot[g, i] > 0 of x[i, :]."""
    onehot = jnp.asarray(onehot, jnp.float32)
    x = jnp.asarray(x, jnp.float32)
    G, N = onehot.shape
    H = x.shape[1]
    if N > 256:
        TN = 128
        N_pad = _round_up(N, TN)
    else:
        N_pad = _round_up(N, 8)
        TN = N_pad
    if G > 64:
        TG = 64
        G_pad = _round_up(G, TG)
    else:
        G_pad = _round_up(G, 8)
        TG = G_pad
    if (G_pad, N_pad) != (G, N):
        onehot = jnp.pad(onehot, ((0, G_pad - G), (0, N_pad - N)))
    if N_pad != N:
        x = jnp.pad(x, ((0, N_pad - N), (0, 0)))
    out = pl.pallas_call(
        _masked_max_kernel,
        out_shape=jax.ShapeDtypeStruct((G_pad, H), jnp.float32),
        grid=(G_pad // TG, N_pad // TN),
        in_specs=[
            pl.BlockSpec((TG, TN), lambda g, n: (g, n)),
            pl.BlockSpec((TN, H), lambda g, n: (n, 0)),
        ],
        out_specs=pl.BlockSpec((TG, H), lambda g, n: (g, 0)),
        scratch_shapes=[pltpu.VMEM((TG, H), jnp.float32)],
        compiler_params=pltpu.CompilerParams(
            dimension_semantics=("parallel", "arbitrary")),
    )(onehot, x)
    return out[:G] if G_pad != G else out


# ====================== device-side graph construction ===========================

@functools.partial(jax.jit, static_argnames=("k", "loop"))
def knn_undirected_adjacency(x_pad, batch_pad, *, k, loop):
    """knn_graph(x, k, batch, loop) followed by to_undirected, as a dense f32 mask.

    Uses a threshold against the k-th smallest per-row distance instead of a
    [Np, k, Np] one_hot tensor (O(N^2) instead of O(N^2 k) traffic).
    """
    # TODO(synk): tie-breaking among exactly-equal distances may differ from torch_cluster.
    Np = x_pad.shape[0]
    D = pairwise_sqdist(x_pad)
    same = (batch_pad[:, None] == batch_pad[None, :]) & (batch_pad[:, None] >= 0)
    BIG = 1e30
    Dm = jnp.where(same, D, BIG)
    if not loop:
        Dm = jnp.where(jnp.eye(Np, dtype=bool), BIG, Dm)
    kth = -jax.lax.top_k(-Dm, k)[0][:, k - 1]               # k-th smallest distance / row
    A = (Dm <= kth[:, None]) & same
    A = A | A.T                                             # to_undirected
    return A.astype(jnp.float32)


@jax.jit
def normalized_cut_weights(x_new_pad, adj):
    """normalized_cut_2d: w[i,j] = ||x_i - x_j||_2 * (1/deg_i + 1/deg_j)."""
    dist = jnp.sqrt(pairwise_sqdist(x_new_pad))
    deg = jnp.sum(adj, axis=1)
    inv = jnp.where(deg > 0, 1.0 / deg, 0.0)
    return dist * (inv[:, None] + inv[None, :])


# ====================== host-side graph glue (data-dependent) =====================

def graclus_greedy(adj_bool, weight, num_nodes):
    """Deterministic 0..N-1 greedy matching (numpy-vectorized per node)."""
    # TODO(synk): torch_cluster.graclus uses an internal (randomized) node ordering;
    #             a deterministic 0..N-1 greedy matching is used here.
    wm = np.where(adj_bool, weight, -np.inf)
    np.fill_diagonal(wm, -np.inf)                  # self loops never matched
    cluster = -np.ones(num_nodes, dtype=np.int64)
    unmatched = np.ones(num_nodes, dtype=bool)
    cid = 0
    for u in range(num_nodes):
        if not unmatched[u]:
            continue
        row = np.where(unmatched, wm[u], -np.inf)
        row[u] = -np.inf
        v = int(np.argmax(row))
        cluster[u] = cid
        unmatched[u] = False
        if np.isfinite(row[v]):
            cluster[v] = cid
            unmatched[v] = False
        cid += 1
    return cluster


# =============================== DRN forward ======================================

def init_linear(key, fan_in, fan_out):
    k1, k2 = jax.random.split(key)
    bound = 1.0 / np.sqrt(fan_in)
    w = jax.random.uniform(k1, (fan_in, fan_out), jnp.float32, -bound, bound)
    b = jax.random.uniform(k2, (fan_out,), jnp.float32, -bound, bound)
    return w, b


def init_params(key):
    params = {"datanorm": jnp.ones((HIDDEN,), jnp.float32)}
    keys = iter(jax.random.split(key, 64))
    params["inputnet"] = [init_linear(next(keys), HIDDEN, HIDDEN)
                          for _ in range(IN_LAYERS)]
    agg = []
    for _ in range(AGG_LAYERS):
        mlp = [init_linear(next(keys), 2 * HIDDEN, 2 * HIDDEN)
               for _ in range(MP_LAYERS - 1)]
        mlp.append(init_linear(next(keys), 2 * HIDDEN, HIDDEN))
        agg.append(mlp)
    params["agg"] = agg
    out = [init_linear(next(keys), HIDDEN, HIDDEN) for _ in range(OUT_LAYERS - 1)]
    out.append(init_linear(next(keys), HIDDEN, OUTPUT_DIM))
    params["output"] = out
    return params


def prep_edgeconv_params(mlp_params):
    """Pre-split/concat the layer-0 weight ([x_i, x_j-x_i]@W0 decomposition) and
    pre-cast the remaining edge-MLP weights to bf16."""
    w0 = jnp.asarray(mlp_params[0][0], jnp.float32)
    b0 = jnp.asarray(mlp_params[0][1], jnp.float32)
    Hd = w0.shape[0] // 2
    w_cat = jnp.concatenate([w0[:Hd] - w0[Hd:], w0[Hd:]], axis=1)   # [H, 2*D0] lane-dense
    b_cat = jnp.concatenate([b0, jnp.zeros_like(b0)])               # [2*D0]
    flat = []
    for (w, b) in mlp_params[1:]:
        flat.append(jnp.asarray(w, MM_DTYPE))
        flat.append(jnp.asarray(b, jnp.float32).reshape(1, -1))
    h_out = mlp_params[-1][0].shape[1]
    return (w_cat, b_cat), flat, h_out


def do_agg_layer(prepped, x, batch):
    """One doLayer(): knn_graph -> to_undirected -> EdgeConv(add) -> normalized_cut ->
    graclus -> max pool by cluster.  Returns (pooled x, pooled batch)."""
    (w_cat, b_cat), rest_flat, h_out = prepped
    N, H = x.shape
    N_pad = _round_up(max(N, 128), 128)                     # lane-dense Np everywhere
    x_pad = jnp.pad(x, ((0, N_pad - N), (0, 0))) if N_pad != N else x
    batch_pad = np.full(N_pad, -1, dtype=np.int32)
    batch_pad[:N] = batch
    batch_pad = jnp.asarray(batch_pad)

    # all of this stays on device (single host sync later for graclus)
    A = knn_undirected_adjacency(x_pad, batch_pad, k=K_NN, loop=LOOP)
    t_all = mlp_forward(x_pad, [(w_cat, b_cat)], acts=("none",))   # hoisted layer-0 matmul
    x_new_pad = edgeconv_fused(t_all, A, rest_flat, h_out)
    W = normalized_cut_weights(x_new_pad, A)

    # host: greedy graclus matching (data-dependent), one fused device->host transfer
    AW = np.asarray(jnp.stack([A[:N, :N], W[:N, :N]]))
    cluster = graclus_greedy(AW[0] > 0.0, AW[1], N)
    C = int(cluster.max()) + 1

    # max_pool / max_pool_x over clusters (running-max Pallas kernel)
    onehot = (jnp.arange(C)[:, None] == jnp.asarray(cluster)[None, :]).astype(jnp.float32)
    x_pooled = masked_max(onehot, x_new_pad[:N])
    batch_pooled = np.zeros(C, dtype=np.int64)
    batch_pooled[cluster] = batch
    return x_pooled, batch_pooled


def drn_forward(params, x, batch, num_graphs):
    """'two_d' forward: datanorm * x -> inputnet -> agg layers -> global max pool
    -> output MLP -> squeeze(-1)."""
    batch = np.asarray(batch)
    x = jnp.asarray(x, jnp.float32) * params["datanorm"][None, :]
    x = mlp_forward(x, params["inputnet"], acts=("elu",) * len(params["inputnet"]))
    for li in range(AGG_LAYERS):
        prepped = prep_edgeconv_params(params["agg"][li])
        x, batch = do_agg_layer(prepped, x, batch)
    # global_max_pool
    onehot_g = (jnp.arange(num_graphs)[:, None] ==
                jnp.asarray(batch)[None, :]).astype(jnp.float32)
    g = masked_max(onehot_g, x)
    acts = ("elu",) * (len(params["output"]) - 1) + ("none",)
    g = mlp_forward(g, params["output"], acts=acts)
    return jnp.squeeze(g, axis=-1)        # shape [num_graphs]


# ==================================== demo =======================================

if __name__ == "__main__":
    key = jax.random.PRNGKey(0)
    k_params, k_x = jax.random.split(key)
    params = init_params(k_params)

    num_graphs = 2
    nodes_per_graph = 48
    N = num_graphs * nodes_per_graph
    # input node features (width == hidden_dim, see NOTE above)
    x = jax.random.normal(k_x, (N, HIDDEN), jnp.float32)
    batch = np.repeat(np.arange(num_graphs), nodes_per_graph).astype(np.int64)

    out = drn_forward(params, x, batch, num_graphs)
    out = jax.block_until_ready(out)
    assert out.shape == (num_graphs,), out.shape
    assert np.all(np.isfinite(np.asarray(out)))
    print("KERNEL_OK")
</pallas_src>

<mosaic_0001>
module attributes {stable_mosaic.version = 11 : i64} {
  func.func @_mlp_kernel(%arg0: i32, %arg1: memref<96x32xbf16, #tpu.memory_space<vmem>>, %arg2: memref<32x32xbf16, #tpu.memory_space<vmem>>, %arg3: memref<1x32xf32, #tpu.memory_space<vmem>>, %arg4: memref<96x32xf32, #tpu.memory_space<vmem>>) attributes {dimension_semantics = [#tpu.dimension_semantics<parallel>], iteration_bounds = array<i64: 1>, scalar_prefetch = 0 : i64, scratch_operands = 0 : i64, tpu.core_type = #tpu.core_type<tc>, window_params = [{transform_indices = @transform_0, window_bounds = array<i64: 96, 32>}, {pipeline_mode = #tpu.pipeline_mode<synchronous>, transform_indices = @transform_1, window_bounds = array<i64: 32, 32>}, {pipeline_mode = #tpu.pipeline_mode<synchronous>, transform_indices = @transform_2, window_bounds = array<i64: 1, 32>}, {transform_indices = @transform_3, window_bounds = array<i64: 96, 32>}]} {
    %c0 = arith.constant 0 : index
    %c0_0 = arith.constant 0 : index
    %0 = vector.load %arg1[%c0, %c0_0] : memref<96x32xbf16, #tpu.memory_space<vmem>>, vector<96x32xbf16>
    %c0_1 = arith.constant 0 : index
    %c0_2 = arith.constant 0 : index
    %1 = vector.load %arg2[%c0_1, %c0_2] : memref<32x32xbf16, #tpu.memory_space<vmem>>, vector<32x32xbf16>
    %c0_3 = arith.constant 0 : index
    %c0_4 = arith.constant 0 : index
    %2 = vector.load %arg3[%c0_3, %c0_4] : memref<1x32xf32, #tpu.memory_space<vmem>>, vector<1x32xf32>
    %cst = arith.constant dense<0.000000e+00> : vector<96x32xf32>
    %3 = tpu.matmul %0, %1, %cst {dimension_numbers = #tpu.dot_dimension_numbers<[1], [0], [0], [1], [0, 0, 1, 1], [], []>} : vector<96x32xbf16>, vector<32x32xbf16>, vector<96x32xf32> -> vector<96x32xf32>
    %4 = vector.broadcast %2 : vector<1x32xf32> to vector<96x32xf32>
    %5 = arith.addf %3, %4 : vector<96x32xf32>
    %cst_5 = arith.constant 0.000000e+00 : f32
    %6 = vector.broadcast %cst_5 : f32 to vector<96x32xf32>
    %7 = arith.cmpf ogt, %5, %6 : vector<96x32xf32>
    %cst_6 = arith.constant 0.000000e+00 : f32
    %8 = vector.broadcast %cst_6 : f32 to vector<96x32xf32>
    %9 = arith.minimumf %5, %8 : vector<96x32xf32>
    %10 = math.exp %9 : vector<96x32xf32>
    %cst_7 = arith.constant 1.000000e+00 : f32
    %11 = vector.broadcast %cst_7 : f32 to vector<96x32xf32>
    %12 = arith.subf %10, %11 : vector<96x32xf32>
    %13 = arith.select %7, %5, %12 : vector<96x32xi1>, vector<96x32xf32>
    %c0_8 = arith.constant 0 : index
    %c0_9 = arith.constant 0 : index
    %14 = vector.load %arg4[%c0_8, %c0_9] : memref<96x32xf32, #tpu.memory_space<vmem>>, vector<96x32xf32>
    tpu.vector_store %arg4[%c0_8, %c0_9], %13 {strides = array<i32>} : memref<96x32xf32, #tpu.memory_space<vmem>>, vector<96x32xf32>,
    return
  }
  func.func @transform_0(%arg0: i32) -> (i32, i32) {
    %c0_i32 = arith.constant 0 : i32
    %c0_i32_0 = arith.constant 0 : i32
    return %arg0, %c0_i32 : i32, i32
  }
  func.func @transform_1(%arg0: i32) -> (i32, i32) {
    %c0_i32 = arith.constant 0 : i32
    %c0_i32_0 = arith.constant 0 : i32
    %c0_i32_1 = arith.constant 0 : i32
    return %c0_i32, %c0_i32_0 : i32, i32
  }
  func.func @transform_2(%arg0: i32) -> (i32, i32) {
    %c0_i32 = arith.constant 0 : i32
    %c0_i32_0 = arith.constant 0 : i32
    %c0_i32_1 = arith.constant 0 : i32
    return %c0_i32, %c0_i32_0 : i32, i32
  }
  func.func @transform_3(%arg0: i32) -> (i32, i32) {
    %c0_i32 = arith.constant 0 : i32
    %c0_i32_0 = arith.constant 0 : i32
    return %arg0, %c0_i32 : i32, i32
  }
}

</mosaic_0001>

<llo_original>
// kernel: tpu_custom_call.1
$region0: #{tpu_custom_call.1}
  #allocation0 [shape = 'u32[]', space=smem, size = 0x4, offset = 0x4, fixed_abs, tag = 'smem constant byte address 0x4 - core index']
  #allocation1 [shape = 'u32[144,128]{1,0:T(1,128)}', space=vmem, size = 0x12000, scoped, tag = 'internal scratch']
  %s0 = inlined_call_operand.vmem [shape: bf16[96,32], index: 0, kind: input, shape index: {}]
  %s1 = inlined_call_operand.vmem [shape: bf16[32,32], index: 1, kind: input, shape index: {}]
  %s2 = inlined_call_operand.vmem [shape: f32[1,32], index: 2, kind: input, shape index: {}]
  %s3 = inlined_call_operand.vmem [shape: f32[96,32], index: 3, kind: output, shape index: {}]
  %s4 = sld [smem:[#allocation0]]
  $region22: #{tpu_custom_call.1} parent=0
    _
  %s6 = ssub.s32 1, %s4
  %s7 = scalar_select 0, %s6, %s4
  // Predicated region
  $region2: #{tpu_custom_call.1} parent=0 // pred_check
    _
  $region3: #{tpu_custom_call.1} parent=0 // pred_check_branch
    %9 = sbr.rel (0) target = $region5
  $region4: #{tpu_custom_call.1} parent=0 // pred_region
    _
  $region5: #{tpu_custom_call.1} parent=0 // pred_fallthru
    _
  // Predicated region
  $region6: #{tpu_custom_call.1} parent=0 // pred_check
    _
  $region7: #{tpu_custom_call.1} parent=0 // pred_check_branch
    %11 = sbr.rel (0) target = $region9
  $region8: #{tpu_custom_call.1} parent=0 // pred_region
    _
  $region9: #{tpu_custom_call.1} parent=0 // pred_fallthru
    _
  // Predicated region
  $region10: #{tpu_custom_call.1} parent=0 // pred_check
    _
  $region11: #{tpu_custom_call.1} parent=0 // pred_check_branch
    %13 = sbr.rel (0) target = $region13
  $region12: #{tpu_custom_call.1} parent=0 // pred_region
    _
  $region13: #{tpu_custom_call.1} parent=0 // pred_fallthru
    _
  %v15 = vld [vmem:[%s0] sm:$0xf]
  %v16 = vld [vmem:[%s0 + $0x4] sm:$0xf]
  %v17 = vld [vmem:[%s0 + $0x8] sm:$0xf]
  %v18 = vld [vmem:[%s0 + $0xc] sm:$0xf]
  %v19 = vld [vmem:[%s0 + $0x10] sm:$0xf]
  %v20 = vld [vmem:[%s0 + $0x14] sm:$0xf]
  %v21 = vld [vmem:[%s0 + $0x18] sm:$0xf]
  %v22 = vld [vmem:[%s0 + $0x1c] sm:$0xf]
  %v23 = vld [vmem:[%s0 + $0x20] sm:$0xf]
  %v24 = vld [vmem:[%s0 + $0x24] sm:$0xf]
  %v25 = vld [vmem:[%s0 + $0x28] sm:$0xf]
  %v26 = vld [vmem:[%s0 + $0x2c] sm:$0xf]
  %v27 = vld [vmem:[%s1] sm:$0xf]
  %v28 = vld [vmem:[%s1 + $0x4] sm:$0xf]
  %v29 = vld [vmem:[%s1 + $0x8] sm:$0xf]
  %v30 = vld [vmem:[%s1 + $0xc] sm:$0xf]
  %v31 = vld [vmem:[%s2] sm:$0x1]
  %v33 = vlaneseq
  %v34 = vshrl.u32 %v33, 7
  %v35 = vsub.s32 0, %v34
  %v36 = vrot.slane %v31, %v35
  %v50 = vunpack.c.l.b16 %v15
  %v51 = vunpack.c.l.b16 %v16
  %v52 = vunpack.c.l.b16 %v17
  %v53 = vunpack.c.l.b16 %v18
  %v54 = vunpack.c.l.b16 %v19
  %v55 = vunpack.c.l.b16 %v20
  %v56 = vunpack.c.l.b16 %v21
  %v57 = vunpack.c.l.b16 %v22
  %v58 = vunpack.c.l.b16 %v23
  %v59 = vunpack.c.l.b16 %v24
  %v60 = vunpack.c.l.b16 %v25
  %v61 = vunpack.c.l.b16 %v26
  %v62 = vpack.c.b16 %v51, %v50
  %v63 = vpack.c.b16 %v53, %v52
  %v64 = vpack.c.b16 %v55, %v54
  %v65 = vpack.c.b16 %v57, %v56
  %v66 = vpack.c.b16 %v59, %v58
  %v67 = vpack.c.b16 %v61, %v60
  %v72 = vunpack.c.l.b16 %v27
  %v73 = vunpack.c.l.b16 %v28
  %v74 = vunpack.c.l.b16 %v29
  %v75 = vunpack.c.l.b16 %v30
  %v76 = vpack.c.b16 %v73, %v72
  %v77 = vpack.c.b16 %v75, %v74
  %vm80 = vcmask 261120
  %v82 = vsel %vm80, %v62, 0
  %v85 = vsel %vm80, %v63, 0
  %v88 = vsel %vm80, %v64, 0
  %v91 = vsel %vm80, %v65, 0
  %v94 = vsel %vm80, %v66, 0
  %v97 = vsel %vm80, %v67, 0
  %99 = vmatprep.subr.bf16.mxu0 0
  %100 = vmatpush1.bf16.msra.mxu0 %v76
  %101 = vmatprep.subr.bf16.mxu0 0
  %102 = vmatpush1.bf16.msra.mxu0 %v77
  %103 = vmatprep.subr.bf16.mxu0 0
  %104 = vmatpush1.bf16.msra.mxu0 0
  %105 = vmatprep.subr.bf16.mxu0 0
  %106 = vmatpush1.bf16.msra.mxu0 0
  %107 = vmatprep.subr.bf16.mxu0 0
  %108 = vmatpush1.bf16.msra.mxu0 0
  %109 = vmatprep.subr.bf16.mxu0 0
  %110 = vmatpush1.bf16.msra.mxu0 0
  %111 = vmatprep.subr.bf16.mxu0 0
  %112 = vmatpush1.bf16.msra.mxu0 0
  %113 = vmatprep.subr.bf16.mxu0 0
  %114 = vmatpush1.bf16.msra.mxu0 0
  %115 = vmatprep.subr.bf16.mxu0 0
  %116 = vmatpush1.bf16.msra.mxu0 0
  %117 = vmatprep.subr.bf16.mxu0 0
  %118 = vmatpush1.bf16.msra.mxu0 0
  %119 = vmatprep.subr.bf16.mxu0 0
  %120 = vmatpush1.bf16.msra.mxu0 0
  %121 = vmatprep.subr.bf16.mxu0 0
  %122 = vmatpush1.bf16.msra.mxu0 0
  %123 = vmatprep.subr.bf16.mxu0 0
  %124 = vmatpush1.bf16.msra.mxu0 0
  %125 = vmatprep.subr.bf16.mxu0 0
  %126 = vmatpush1.bf16.msra.mxu0 0
  %127 = vmatprep.subr.bf16.mxu0 0
  %128 = vmatpush1.bf16.msra.mxu0 0
  %129 = vmatprep.subr.bf16.mxu0 0
  %130 = vmatpush1.bf16.msra.mxu0 0
  %131 = vmatprep.mubr.bf16.mxu0 0
  %132 = vmatmul.mubr.bf16.gmra.mrb[0].mxu0 %v82
  %v133 = vpop.f32.mrb[0].mxu0
  %v134 = vadd.f32 %v36, %v133
  %v135 = vpop.f32.mrb[0].mxu0
  %v136 = vpop.f32.mrb[0].mxu0
  %v137 = vadd.f32 %v36, %v136
  %v138 = vpop.f32.mrb[0].mxu0
  %139 = vmatprep.mubr.bf16.mxu0 0
  %140 = vmatmul.mubr.bf16.gmra.mrb[0].mxu0 %v85
  %v141 = vpop.f32.mrb[0].mxu0
  %v142 = vadd.f32 %v36, %v141
  %v143 = vpop.f32.mrb[0].mxu0
  %v144 = vpop.f32.mrb[0].mxu0
  %v145 = vadd.f32 %v36, %v144
  %v146 = vpop.f32.mrb[0].mxu0
  %147 = vmatprep.mubr.bf16.mxu0 0
  %148 = vmatmul.mubr.bf16.gmra.mrb[0].mxu0 %v88
  %v149 = vpop.f32.mrb[0].mxu0
  %v150 = vadd.f32 %v36, %v149
  %v151 = vpop.f32.mrb[0].mxu0
  %v152 = vpop.f32.mrb[0].mxu0
  %v153 = vadd.f32 %v36, %v152
  %v154 = vpop.f32.mrb[0].mxu0
  %155 = vmatprep.mubr.bf16.mxu0 0
  %156 = vmatmul.mubr.bf16.gmra.mrb[0].mxu0 %v91
  %v157 = vpop.f32.mrb[0].mxu0
  %v158 = vadd.f32 %v36, %v157
  %v159 = vpop.f32.mrb[0].mxu0
  %v160 = vpop.f32.mrb[0].mxu0
  %v161 = vadd.f32 %v36, %v160
  %v162 = vpop.f32.mrb[0].mxu0
  %163 = vmatprep.mubr.bf16.mxu0 0
  %164 = vmatmul.mubr.bf16.gmra.mrb[0].mxu0 %v94
  %v165 = vpop.f32.mrb[0].mxu0
  %v166 = vadd.f32 %v36, %v165
  %v167 = vpop.f32.mrb[0].mxu0
  %v168 = vpop.f32.mrb[0].mxu0
  %v169 = vadd.f32 %v36, %v168
  %v170 = vpop.f32.mrb[0].mxu0
  %171 = vmatprep.mubr.bf16.mxu0 0
  %172 = vmatmul.mubr.bf16.gmra.mrb[0].mxu0 %v97
  %v173 = vpop.f32.mrb[0].mxu0
  %v174 = vadd.f32 %v36, %v173
  %v175 = vpop.f32.mrb[0].mxu0
  %v176 = vpop.f32.mrb[0].mxu0
  %v177 = vadd.f32 %v36, %v176
  %v178 = vpop.f32.mrb[0].mxu0
  %179 = vdwg.mxu0
  %vm180 = vcmp.gt.f32.partialorder %v134, 0.0
  %vm181 = vcmp.gt.f32.partialorder %v137, 0.0
  %vm182 = vcmp.gt.f32.partialorder %v142, 0.0
  %vm183 = vcmp.gt.f32.partialorder %v145, 0.0
  %vm184 = vcmp.gt.f32.partialorder %v150, 0.0
  %vm185 = vcmp.gt.f32.partialorder %v153, 0.0
  %vm186 = vcmp.gt.f32.partialorder %v158, 0.0
  %vm187 = vcmp.gt.f32.partialorder %v161, 0.0
  %vm188 = vcmp.gt.f32.partialorder %v166, 0.0
  %vm189 = vcmp.gt.f32.partialorder %v169, 0.0
  %vm190 = vcmp.gt.f32.partialorder %v174, 0.0
  %vm191 = vcmp.gt.f32.partialorder %v177, 0.0
  %v192 = vmin.f32 %v134, 0.0
  %v193 = vmin.f32 %v137, 0.0
  %v194 = vmin.f32 %v142, 0.0
  %v195 = vmin.f32 %v145, 0.0
  %v196 = vmin.f32 %v150, 0.0
  %v197 = vmin.f32 %v153, 0.0
  %v198 = vmin.f32 %v158, 0.0
  %v199 = vmin.f32 %v161, 0.0
  %v200 = vmin.f32 %v166, 0.0
  %v201 = vmin.f32 %v169, 0.0
  %v202 = vmin.f32 %v174, 0.0
  %v203 = vmin.f32 %v177, 0.0
  %v204 = vmul.f32 %v192, 1.442695
  %v205 = vpow.pop %v204
  %v206 = vmul.f32 %v193, 1.442695
  %v207 = vpow.pop %v206
  %v208 = vmul.f32 %v194, 1.442695
  %v209 = vpow.pop %v208
  %v210 = vmul.f32 %v195, 1.442695
  %v211 = vpow.pop %v210
  %v212 = vmul.f32 %v196, 1.442695
  %v213 = vpow.pop %v212
  %v214 = vmul.f32 %v197, 1.442695
  %v215 = vpow.pop %v214
  %v216 = vmul.f32 %v198, 1.442695
  %v217 = vpow.pop %v216
  %v218 = vmul.f32 %v199, 1.442695
  %v219 = vpow.pop %v218
  %v220 = vmul.f32 %v200, 1.442695
  %v221 = vpow.pop %v220
  %v222 = vmul.f32 %v201, 1.442695
  %v223 = vpow.pop %v222
  %v224 = vmul.f32 %v202, 1.442695
  %v225 = vpow.pop %v224
  %v226 = vmul.f32 %v203, 1.442695
  %v227 = vpow.pop %v226
  %v228 = vsub.f32 %v205, 1.0
  %v229 = vsub.f32 %v207, 1.0
  %v230 = vsub.f32 %v209, 1.0
  %v231 = vsub.f32 %v211, 1.0
  %v232 = vsub.f32 %v213, 1.0
  %v233 = vsub.f32 %v215, 1.0
  %v234 = vsub.f32 %v217, 1.0
  %v235 = vsub.f32 %v219, 1.0
  %v236 = vsub.f32 %v221, 1.0
  %v237 = vsub.f32 %v223, 1.0
  %v238 = vsub.f32 %v225, 1.0
  %v239 = vsub.f32 %v227, 1.0
  %v240 = vsel %vm180, %v134, %v228
  %v241 = vsel %vm181, %v137, %v229
  %v242 = vsel %vm182, %v142, %v230
  %v243 = vsel %vm183, %v145, %v231
  %v244 = vsel %vm184, %v150, %v232
  %v245 = vsel %vm185, %v153, %v233
  %v246 = vsel %vm186, %v158, %v234
  %v247 = vsel %vm187, %v161, %v235
  %v248 = vsel %vm188, %v166, %v236
  %v249 = vsel %vm189, %v169, %v237
  %v250 = vsel %vm190, %v174, %v238
  %v251 = vsel %vm191, %v177, %v239
  %252 = vst.msk [vmem:[%s3] sm:$0xff] %vm80, %v240
  %253 = vst.msk [vmem:[%s3 + $0x8] sm:$0xff] %vm80, %v241
  %254 = vst.msk [vmem:[%s3 + $0x10] sm:$0xff] %vm80, %v242
  %255 = vst.msk [vmem:[%s3 + $0x18] sm:$0xff] %vm80, %v243
  %256 = vst.msk [vmem:[%s3 + $0x20] sm:$0xff] %vm80, %v244
  %257 = vst.msk [vmem:[%s3 + $0x28] sm:$0xff] %vm80, %v245
  %258 = vst.msk [vmem:[%s3 + $0x30] sm:$0xff] %vm80, %v246
  %259 = vst.msk [vmem:[%s3 + $0x38] sm:$0xff] %vm80, %v247
  %260 = vst.msk [vmem:[%s3 + $0x40] sm:$0xff] %vm80, %v248
  %261 = vst.msk [vmem:[%s3 + $0x48] sm:$0xff] %vm80, %v249
  %262 = vst.msk [vmem:[%s3 + $0x50] sm:$0xff] %vm80, %v250
  %263 = vst.msk [vmem:[%s3 + $0x58] sm:$0xff] %vm80, %v251
  // Predicated region
  $region14: #{tpu_custom_call.1} parent=0 // pred_check
    _
  $region15: #{tpu_custom_call.1} parent=0 // pred_check_branch
    %265 = sbr.rel (0) target = $region17
  $region16: #{tpu_custom_call.1} parent=0 // pred_region
    _
  $region17: #{tpu_custom_call.1} parent=0 // pred_fallthru
    _
  // Predicated region
  $region18: #{tpu_custom_call.1} parent=0 // pred_check
    _
  $region19: #{tpu_custom_call.1} parent=0 // pred_check_branch
    %267 = sbr.rel (0) target = $region21
  $region20: #{tpu_custom_call.1} parent=0 // pred_region
    _
  $region21: #{tpu_custom_call.1} parent=0 // pred_fallthru
    _

</llo_original>
